<compile_context>
chip_gen: v7x
topology: tpu7x:2x2x1
jax: 0.10.0
libtpu: 0.0.40
codegen_flags: <defaults>
</compile_context>

<pallas_src>
import jax
import jax.numpy as jnp
from jax.experimental import pallas as pl
from jax.experimental.pallas import tpu as pltpu

MIB = 1024 * 1024


# ------------------------------ small helpers -------------------------------

def _round_up(x, m):
    return ((x + m - 1) // m) * m


def _physical_vmem_bytes():
    """Physical VMEM of the local TPU; falls back to the v7x worst case."""
    try:
        return int(pltpu.get_tpu_info().vmem_capacity_bytes)
    except Exception:
        return 64 * MIB  # conservative: v7x has 64 MiB per TensorCore


def _vmem_budget_bytes():
    # Leave headroom for compiler scratch / pipelining buffers.
    return min((_physical_vmem_bytes() * 3) // 4, 100 * MIB)


def _choose_fc_tile(n_out, din_pad, b_pad, w_itemsize, budget):
    """Output-feature tile for fc_out.

    Largest multiple of 128 (<= 2048) whose double-buffered weight tile +
    resident activations + output tiles fit the VMEM budget; n_out is padded
    up to a multiple of the tile (no divisor search -> no 128-wide cliff).
    Capped so the grid has >= 2 steps when possible (v7x megacore).
    """
    n128 = _round_up(n_out, 128)

    def fits(t):
        need = (
            b_pad * din_pad * 4            # resident activations (f32)
            + 2 * din_pad * t * w_itemsize  # double-buffered weight tile
            + 2 * b_pad * t * 4             # double-buffered output tile
            + 2 * t * 4                     # bias tile
        )
        return need <= budget

    t = min(2048, n128)
    while t > 128 and not fits(t):
        t -= 128

    # Prefer >= 2 grid steps so ("parallel",) shards across v7x's 2 TCs.
    if n128 >= 256:
        t_half = _round_up((n128 + 1) // 2, 128)
        t = min(t, t_half)
    t = max(t, 128)

    n_pad = _round_up(n_out, t)
    return t, n_pad


# ------------------------------ Pallas kernels -------------------------------

def _make_fused_mlp_kernel(num_layers):
    """Fused (Linear + folded-BN + ReLU) x num_layers, one batch tile."""

    def kernel(*refs):
        x_ref = refs[0]
        o_ref = refs[-1]
        h = x_ref[...]
        for i in range(num_layers):
            w_ref = refs[1 + 2 * i]
            b_ref = refs[2 + 2 * i]
            h = jnp.dot(h, w_ref[...], preferred_element_type=jnp.float32)
            h = jnp.maximum(h + b_ref[...], 0.0)  # folded BN already in w/b
        o_ref[...] = h.astype(o_ref.dtype)

    return kernel


def _fc_out_kernel(x_ref, w_ref, b_ref, o_ref):
    w = w_ref[...]
    x = x_ref[...]
    if x.dtype != w.dtype:  # bf16 weight streaming: run the MXU in bf16
        x = x.astype(w.dtype)
    y = jnp.dot(x, w, preferred_element_type=jnp.float32)
    o_ref[...] = (y + b_ref[...].astype(jnp.float32)).astype(o_ref.dtype)


# ------------------------------ kernel wrappers ------------------------------

def fused_mlp(x, layer_params, b_tile, vmem_limit_bytes):
    """x: (B_pad, D0_pad), B_pad % b_tile == 0; layer_params: [(w_pad, b_pad)].

    Single pallas_call over a batch-tile grid; weights/biases stay resident.
    """
    B, D0 = x.shape
    d_last = layer_params[-1][0].shape[1]
    grid = (B // b_tile,)

    in_specs = [pl.BlockSpec((b_tile, D0), lambda i: (i, 0))]
    operands = [x]
    for w, b in layer_params:
        in_specs.append(pl.BlockSpec(w.shape, lambda i: (0, 0)))  # resident
        in_specs.append(pl.BlockSpec(b.shape, lambda i: (0, 0)))  # resident
        operands.append(w)
        operands.append(b)

    return pl.pallas_call(
        _make_fused_mlp_kernel(len(layer_params)),
        out_shape=jax.ShapeDtypeStruct((B, d_last), x.dtype),
        grid=grid,
        in_specs=in_specs,
        out_specs=pl.BlockSpec((b_tile, d_last), lambda i: (i, 0)),
        compiler_params=pltpu.CompilerParams(
            dimension_semantics=("parallel",),
            vmem_limit_bytes=vmem_limit_bytes,
        ),
    )(*operands)


def fc_out_tiled(x, w, b, tile_n, vmem_limit_bytes):
    """Final Linear, tiled over output features with weight streaming.

    x: (B_pad, Din_pad) f32, w: (Din_pad, N_pad) f32/bf16, b: (1, N_pad) f32,
    N_pad % tile_n == 0.
    """
    B, Din = x.shape
    n_out = w.shape[1]
    grid = (n_out // tile_n,)

    bytes_accessed = (
        B * Din * x.dtype.itemsize
        + Din * n_out * w.dtype.itemsize
        + n_out * b.dtype.itemsize
        + B * n_out * x.dtype.itemsize
    )
    # NOTE: pipeline_mode=pl.Buffered(3) on the weight BlockSpec is a further
    # option when the grid has many small tiles (sweep vs default double buffer).
    return pl.pallas_call(
        _fc_out_kernel,
        out_shape=jax.ShapeDtypeStruct((B, n_out), x.dtype),
        grid=grid,
        in_specs=[
            pl.BlockSpec((B, Din), lambda j: (0, 0)),       # activations resident
            pl.BlockSpec((Din, tile_n), lambda j: (0, j)),  # weight streams (dbl-buffered)
            pl.BlockSpec((1, tile_n), lambda j: (0, j)),
        ],
        out_specs=pl.BlockSpec((B, tile_n), lambda j: (0, j)),
        compiler_params=pltpu.CompilerParams(
            dimension_semantics=("parallel",),
            vmem_limit_bytes=vmem_limit_bytes,
        ),
        cost_estimate=pl.CostEstimate(
            flops=2 * B * Din * n_out,
            transcendentals=0,
            bytes_accessed=bytes_accessed,
        ),
    )(x, w, b)


# --------------------------- module (glue / params) --------------------------

class PointNetDecoderConfig:
    def __init__(self, num_points, decoder_dims, decoder_output_dim):
        self.num_points = num_points
        self.decoder_dims = list(decoder_dims)
        self.decoder_output_dim = decoder_output_dim


class PointNetDecoderPallas:
    """JAX/Pallas equivalent of the PyTorch PointNetDecoder (eval-mode BN)."""

    BN_EPS = 1e-5

    def __init__(self, config, key, stream_fc_weights_bf16=False):
        self.num_points = config.num_points
        self.input_dim = config.decoder_dims[0]
        self.output_dim = config.decoder_output_dim
        self.config = config
        self.vmem_budget = _vmem_budget_bytes()

        dims = config.decoder_dims

        # ----- hidden linear_block layers -----
        self.layers_ref = []      # original (w, b, scale, shift) for the JAX reference
        self.layers_pallas = []   # folded + padded (w', b') for the fused kernel
        for in_feat, out_feat in zip(dims, dims[1:]):
            key, kw, kb, kg, kbe, km, kv = jax.random.split(key, 7)
            bound = 1.0 / jnp.sqrt(in_feat)
            w = jax.random.uniform(kw, (in_feat, out_feat), jnp.float32, -bound, bound)
            b = jax.random.uniform(kb, (1, out_feat), jnp.float32, -bound, bound)
            # BatchNorm1d params / running stats (deterministic, non-trivial).
            gamma = 1.0 + 0.1 * jax.random.normal(kg, (1, out_feat), jnp.float32)
            beta = 0.1 * jax.random.normal(kbe, (1, out_feat), jnp.float32)
            running_mean = 0.05 * jax.random.normal(km, (1, out_feat), jnp.float32)
            running_var = 1.0 + 0.1 * jax.random.uniform(kv, (1, out_feat), jnp.float32)

            scale = gamma / jnp.sqrt(running_var + self.BN_EPS)
            shift = beta - running_mean * scale
            self.layers_ref.append((w, b, scale, shift))

            # Fold BN into the linear layer, then zero-pad to lane grid.
            w_f = w * scale
            b_f = b * scale + shift
            in_pad = _round_up(in_feat, 128)
            out_pad = _round_up(out_feat, 128)
            w_p = jnp.zeros((in_pad, out_pad), jnp.float32).at[:in_feat, :out_feat].set(w_f)
            b_p = jnp.zeros((1, out_pad), jnp.float32).at[:, :out_feat].set(b_f)
            self.layers_pallas.append((w_p, b_p))

        # ----- fc_out: dims[-1] -> num_points * output_dim -----
        key, kw, kb = jax.random.split(key, 3)
        in_feat = dims[-1]
        n_out = self.num_points * self.output_dim
        bound = 1.0 / jnp.sqrt(in_feat)
        self.w_out = jax.random.uniform(kw, (in_feat, n_out), jnp.float32, -bound, bound)
        self.b_out = jax.random.uniform(kb, (1, n_out), jnp.float32, -bound, bound)

        self.d0_pad = _round_up(dims[0], 128)
        d_last_pad = _round_up(in_feat, 128)
        self.n_out = n_out

        fc_w_dtype = jnp.bfloat16 if stream_fc_weights_bf16 else jnp.float32
        w_itemsize = jnp.dtype(fc_w_dtype).itemsize
        # Budget the tile assuming up to 256 resident activation rows.
        self.tile_n, n_out_pad = _choose_fc_tile(
            n_out, d_last_pad, 256, w_itemsize, self.vmem_budget)

        self.w_out_p = (
            jnp.zeros((d_last_pad, n_out_pad), jnp.float32)
            .at[:in_feat, :n_out].set(self.w_out)
        ).astype(fc_w_dtype)
        self.b_out_p = jnp.zeros((1, n_out_pad), jnp.float32).at[:, :n_out].set(self.b_out)

    # --- VMEM limits computed from actual resident bytes (not fixed 32 MiB) ---

    def _fused_vmem_limit(self, b_tile):
        d_last = self.layers_pallas[-1][0].shape[1] if self.layers_pallas else self.d0_pad
        resident = 4 * (2 * b_tile * self.d0_pad + 2 * b_tile * d_last)
        for w, b in self.layers_pallas:
            resident += (w.size + b.size) * 4
        resident = int(resident * 1.25) + 8 * MIB  # intermediates + compiler scratch
        limit = min(max(resident, 32 * MIB), self.vmem_budget)
        # TODO(synk): if resident weights ever exceed the per-generation budget
        # (e.g. v7x 64 MiB), stream/tile the widest layer instead of keeping it
        # resident; not needed at these decoder dims.
        return max(limit, resident)

    def _fc_vmem_limit(self, b_pad):
        din = self.w_out_p.shape[0]
        w_itemsize = jnp.dtype(self.w_out_p.dtype).itemsize
        resident = (b_pad * din * 4
                    + 2 * din * self.tile_n * w_itemsize
                    + 2 * b_pad * self.tile_n * 4
                    + 2 * self.tile_n * 4)
        resident = int(resident * 1.25) + 8 * MIB
        limit = min(max(resident, 32 * MIB), self.vmem_budget)
        return max(limit, resident)

    # ----------------------------- forward pass ------------------------------

    def __call__(self, x):
        batch_size = x.shape[0]
        x = x.reshape(batch_size, self.input_dim)

        # Batch tiling: tiny batches -> single block; large batches -> 256-row
        # tiles (pipelined, "parallel" across v7x TensorCores).
        rows = max(batch_size, 1)
        b_tile = _round_up(rows, 8) if rows <= 256 else 256
        b_pad = _round_up(rows, b_tile)

        # Host-side padding (layout plumbing): features -> x128 lanes.
        x_p = jnp.zeros((b_pad, self.d0_pad), jnp.float32)
        x_p = x_p.at[:batch_size, : self.input_dim].set(x)

        if self.layers_pallas:
            h = fused_mlp(x_p, self.layers_pallas, b_tile, self._fused_vmem_limit(b_tile))
        else:
            h = x_p

        y = fc_out_tiled(h, self.w_out_p, self.b_out_p, self.tile_n,
                         self._fc_vmem_limit(b_pad))

        y = y[:batch_size, : self.n_out]
        # matches torch .view(B, output_dim, num_points) (row-major)
        return y.reshape(batch_size, self.output_dim, self.num_points)

    # Pure-JAX reference of the same math (unfolded, unpadded), for verification.
    def reference(self, x):
        batch_size = x.shape[0]
        x = x.reshape(batch_size, self.input_dim)
        for (w, b, scale, shift) in self.layers_ref:
            x = jnp.maximum((x @ w + b) * scale + shift, 0.0)
        x = x @ self.w_out + self.b_out
        return x.reshape(batch_size, self.output_dim, self.num_points)


# ----------------------------------- main ------------------------------------

if __name__ == "__main__":
    key = jax.random.PRNGKey(0)
    k_params, k_x = jax.random.split(key)

    config = PointNetDecoderConfig(
        num_points=16,
        decoder_dims=[32, 64, 128],
        decoder_output_dim=3,
    )
    # f32 weight streaming so the 1e-5 check is exact; set
    # stream_fc_weights_bf16=True at real sizes (relax tolerance accordingly).
    model = PointNetDecoderPallas(config, k_params, stream_fc_weights_bf16=False)

    batch = 2
    x = jax.random.normal(k_x, (batch, config.decoder_dims[0]), jnp.float32)

    out = model(x)
    out = jax.block_until_ready(out)

    assert out.shape == (batch, config.decoder_output_dim, config.num_points), out.shape

    ref = jax.block_until_ready(model.reference(x))
    assert jnp.allclose(out, ref, atol=1e-5, rtol=1e-5), "mismatch vs JAX reference"

    print("KERNEL_OK")
</pallas_src>

<mosaic_0001>
module attributes {stable_mosaic.version = 11 : i64} {
  func.func @kernel(%arg0: i32, %arg1: memref<8x128xf32, #tpu.memory_space<vmem>>, %arg2: memref<128x128xf32, #tpu.memory_space<vmem>>, %arg3: memref<1x128xf32, #tpu.memory_space<vmem>>, %arg4: memref<128x128xf32, #tpu.memory_space<vmem>>, %arg5: memref<1x128xf32, #tpu.memory_space<vmem>>, %arg6: memref<8x128xf32, #tpu.memory_space<vmem>>) attributes {dimension_semantics = [#tpu.dimension_semantics<parallel>], iteration_bounds = array<i64: 1>, scalar_prefetch = 0 : i64, scratch_operands = 0 : i64, tpu.core_type = #tpu.core_type<tc>, window_params = [{transform_indices = @transform_0, window_bounds = array<i64: 8, 128>}, {pipeline_mode = #tpu.pipeline_mode<synchronous>, transform_indices = @transform_1, window_bounds = array<i64: 128, 128>}, {pipeline_mode = #tpu.pipeline_mode<synchronous>, transform_indices = @transform_2, window_bounds = array<i64: 1, 128>}, {pipeline_mode = #tpu.pipeline_mode<synchronous>, transform_indices = @transform_3, window_bounds = array<i64: 128, 128>}, {pipeline_mode = #tpu.pipeline_mode<synchronous>, transform_indices = @transform_4, window_bounds = array<i64: 1, 128>}, {transform_indices = @transform_5, window_bounds = array<i64: 8, 128>}]} {
    %c0 = arith.constant 0 : index
    %c0_0 = arith.constant 0 : index
    %0 = vector.load %arg1[%c0, %c0_0] : memref<8x128xf32, #tpu.memory_space<vmem>>, vector<8x128xf32>
    %c0_1 = arith.constant 0 : index
    %c0_2 = arith.constant 0 : index
    %1 = vector.load %arg2[%c0_1, %c0_2] : memref<128x128xf32, #tpu.memory_space<vmem>>, vector<128x128xf32>
    %cst = arith.constant dense<0.000000e+00> : vector<8x128xf32>
    %2 = tpu.matmul %0, %1, %cst {dimension_numbers = #tpu.dot_dimension_numbers<[1], [0], [0], [1], [0, 0, 1, 1], [], []>} : vector<8x128xf32>, vector<128x128xf32>, vector<8x128xf32> -> vector<8x128xf32>
    %c0_3 = arith.constant 0 : index
    %c0_4 = arith.constant 0 : index
    %3 = vector.load %arg3[%c0_3, %c0_4] : memref<1x128xf32, #tpu.memory_space<vmem>>, vector<1x128xf32>
    %4 = vector.broadcast %3 : vector<1x128xf32> to vector<8x128xf32>
    %5 = arith.addf %2, %4 : vector<8x128xf32>
    %cst_5 = arith.constant 0.000000e+00 : f32
    %6 = vector.broadcast %cst_5 : f32 to vector<8x128xf32>
    %7 = arith.maximumf %5, %6 : vector<8x128xf32>
    %c0_6 = arith.constant 0 : index
    %c0_7 = arith.constant 0 : index
    %8 = vector.load %arg4[%c0_6, %c0_7] : memref<128x128xf32, #tpu.memory_space<vmem>>, vector<128x128xf32>
    %cst_8 = arith.constant dense<0.000000e+00> : vector<8x128xf32>
    %9 = tpu.matmul %7, %8, %cst_8 {dimension_numbers = #tpu.dot_dimension_numbers<[1], [0], [0], [1], [0, 0, 1, 1], [], []>} : vector<8x128xf32>, vector<128x128xf32>, vector<8x128xf32> -> vector<8x128xf32>
    %c0_9 = arith.constant 0 : index
    %c0_10 = arith.constant 0 : index
    %10 = vector.load %arg5[%c0_9, %c0_10] : memref<1x128xf32, #tpu.memory_space<vmem>>, vector<1x128xf32>
    %11 = vector.broadcast %10 : vector<1x128xf32> to vector<8x128xf32>
    %12 = arith.addf %9, %11 : vector<8x128xf32>
    %cst_11 = arith.constant 0.000000e+00 : f32
    %13 = vector.broadcast %cst_11 : f32 to vector<8x128xf32>
    %14 = arith.maximumf %12, %13 : vector<8x128xf32>
    %c0_12 = arith.constant 0 : index
    %c0_13 = arith.constant 0 : index
    %15 = vector.load %arg6[%c0_12, %c0_13] : memref<8x128xf32, #tpu.memory_space<vmem>>, vector<8x128xf32>
    tpu.vector_store %arg6[%c0_12, %c0_13], %14 {strides = array<i32>} : memref<8x128xf32, #tpu.memory_space<vmem>>, vector<8x128xf32>,
    return
  }
  func.func @transform_0(%arg0: i32) -> (i32, i32) {
    %c0_i32 = arith.constant 0 : i32
    %c0_i32_0 = arith.constant 0 : i32
    return %arg0, %c0_i32 : i32, i32
  }
  func.func @transform_1(%arg0: i32) -> (i32, i32) {
    %c0_i32 = arith.constant 0 : i32
    %c0_i32_0 = arith.constant 0 : i32
    %c0_i32_1 = arith.constant 0 : i32
    return %c0_i32, %c0_i32_0 : i32, i32
  }
  func.func @transform_2(%arg0: i32) -> (i32, i32) {
    %c0_i32 = arith.constant 0 : i32
    %c0_i32_0 = arith.constant 0 : i32
    %c0_i32_1 = arith.constant 0 : i32
    return %c0_i32, %c0_i32_0 : i32, i32
  }
  func.func @transform_3(%arg0: i32) -> (i32, i32) {
    %c0_i32 = arith.constant 0 : i32
    %c0_i32_0 = arith.constant 0 : i32
    %c0_i32_1 = arith.constant 0 : i32
    return %c0_i32, %c0_i32_0 : i32, i32
  }
  func.func @transform_4(%arg0: i32) -> (i32, i32) {
    %c0_i32 = arith.constant 0 : i32
    %c0_i32_0 = arith.constant 0 : i32
    %c0_i32_1 = arith.constant 0 : i32
    return %c0_i32, %c0_i32_0 : i32, i32
  }
  func.func @transform_5(%arg0: i32) -> (i32, i32) {
    %c0_i32 = arith.constant 0 : i32
    %c0_i32_0 = arith.constant 0 : i32
    return %arg0, %c0_i32 : i32, i32
  }
}

</mosaic_0001>

<llo_original>
// kernel: tpu_custom_call.1
$region0: #{tpu_custom_call.1}
  #allocation0 [shape = 'u32[]', space=smem, size = 0x4, offset = 0x4, fixed_abs, tag = 'smem constant byte address 0x4 - core index']
  #allocation1 [shape = 'u32[144,128]{1,0:T(1,128)}', space=vmem, size = 0x12000, scoped, tag = 'internal scratch']
  %s0 = inlined_call_operand.hbm [shape: f32[8,128], index: 0, kind: input, shape index: {}]
  %s1 = inlined_call_operand.hbm [shape: f32[128,128], index: 1, kind: input, shape index: {}]
  %s2 = inlined_call_operand.vmem [shape: f32[1,128], index: 2, kind: input, shape index: {}]
  %s3 = inlined_call_operand.hbm [shape: f32[128,128], index: 3, kind: input, shape index: {}]
  %s4 = inlined_call_operand.vmem [shape: f32[1,128], index: 4, kind: input, shape index: {}]
  %s5 = inlined_call_operand.hbm [shape: f32[8,128], index: 5, kind: output, shape index: {}]
  %s6 = sld [smem:[#allocation0]]
  $region42: #{tpu_custom_call.1} parent=0
    _
  %s8 = ssub.s32 1, %s6
  %s9 = scalar_select 0, %s8, %s6
  $region1: #{tpu_custom_call.1} parent=0
    #allocation2 [shape = 'u8[4096]{0}', space=vmem, size = 0x1000, scoped, tag = 'input window, operand 0, single buffered']
    #allocation3 [shape = 's32[1]{0}', space=sflag, size = 0x4, scoped, tag = 'scoped memory for tpu_custom_call.1']
    #allocation4 [shape = 's32[1]{0}', space=sflag, size = 0x4, scoped, tag = 'scoped memory for tpu_custom_call.1']
    #allocation5 [shape = 'u8[65536]{0}', space=vmem, size = 0x10000, scoped, tag = 'input window, operand 1, single buffered']
    #allocation6 [shape = 's32[1]{0}', space=sflag, size = 0x4, scoped, tag = 'scoped memory for tpu_custom_call.1']
    #allocation7 [shape = 'u8[65536]{0}', space=vmem, size = 0x10000, scoped, tag = 'input window, operand 3, single buffered']
    #allocation8 [shape = 'u8[4096]{0}', space=vmem, size = 0x1000, scoped, tag = 'output window, operand 0, single buffered']
    %10 = vsyncpa [#allocation3], 0
    %11 = vsyncpa [#allocation6], 0
    %12 = vsyncpa [#allocation4], 0
    // Predicated region
    $region2: #{tpu_custom_call.1} parent=1 // pred_check
      _
    $region3: #{tpu_custom_call.1} parent=1 // pred_check_branch
      %14 = sbr.rel (0) target = $region5
    $region4: #{tpu_custom_call.1} parent=1 // pred_region
      %s16 = ssub.s32 128, 128
      %17 = vsyncadd [#allocation3], %s16
      %s19 = sshll.u32 [#allocation2], 4
      %s20 = int_to_ptr.vmem [resolvable:$true] %s19
      %22 = dma.hbm_to_vmem [thread:$0]  %s0, 128, %s20, [#allocation3]
    $region5: #{tpu_custom_call.1} parent=1 // pred_fallthru
      _
    // Predicated region
    $region6: #{tpu_custom_call.1} parent=1 // pred_check
      _
    $region7: #{tpu_custom_call.1} parent=1 // pred_check_branch
      %24 = sbr.rel (0) target = $region9
    $region8: #{tpu_custom_call.1} parent=1 // pred_region
      %s26 = ssub.s32 2048, 2048
      %27 = vsyncadd [#allocation6], %s26
      %s28 = sshll.u32 [#allocation5], 4
      %s29 = int_to_ptr.vmem [resolvable:$true] %s28
      %34 = dma.hbm_to_vmem [thread:$0]  %s1, 2048, %s29, [#allocation6], 128, 128, 8
    $region9: #{tpu_custom_call.1} parent=1 // pred_fallthru
      _
    // Predicated region
    $region10: #{tpu_custom_call.1} parent=1 // pred_check
      _
    $region11: #{tpu_custom_call.1} parent=1 // pred_check_branch
      %36 = sbr.rel (0) target = $region13
    $region12: #{tpu_custom_call.1} parent=1 // pred_region
      _
    $region13: #{tpu_custom_call.1} parent=1 // pred_fallthru
      _
    // Predicated region
    $region14: #{tpu_custom_call.1} parent=1 // pred_check
      _
    $region15: #{tpu_custom_call.1} parent=1 // pred_check_branch
      %38 = sbr.rel (0) target = $region17
    $region16: #{tpu_custom_call.1} parent=1 // pred_region
      %s40 = ssub.s32 2048, 2048
      %41 = vsyncadd [#allocation6], %s40
      %s42 = sshll.u32 [#allocation7], 4
      %s43 = int_to_ptr.vmem [resolvable:$true] %s42
      %48 = dma.hbm_to_vmem [thread:$0]  %s3, 2048, %s43, [#allocation6], 128, 128, 8
    $region17: #{tpu_custom_call.1} parent=1 // pred_fallthru
      _
    // Predicated region
    $region18: #{tpu_custom_call.1} parent=1 // pred_check
      _
    $region19: #{tpu_custom_call.1} parent=1 // pred_check_branch
      %50 = sbr.rel (0) target = $region21
    $region20: #{tpu_custom_call.1} parent=1 // pred_region
      _
    $region21: #{tpu_custom_call.1} parent=1 // pred_fallthru
      _
    // Predicated region
    $region22: #{tpu_custom_call.1} parent=1 // pred_check
      _
    $region23: #{tpu_custom_call.1} parent=1 // pred_check_branch
      %52 = sbr.rel (0) target = $region25
    $region24: #{tpu_custom_call.1} parent=1 // pred_region
      %53 = dma.done [#allocation3], 128
    $region25: #{tpu_custom_call.1} parent=1 // pred_fallthru
      _
    // Predicated region
    $region26: #{tpu_custom_call.1} parent=1 // pred_check
      _
    $region27: #{tpu_custom_call.1} parent=1 // pred_check_branch
      %55 = sbr.rel (0) target = $region29
    $region28: #{tpu_custom_call.1} parent=1 // pred_region
      %56 = dma.done [#allocation6], 2048
    $region29: #{tpu_custom_call.1} parent=1 // pred_fallthru
      _
    // Predicated region
    $region30: #{tpu_custom_call.1} parent=1 // pred_check
      _
    $region31: #{tpu_custom_call.1} parent=1 // pred_check_branch
      %58 = sbr.rel (0) target = $region33
    $region32: #{tpu_custom_call.1} parent=1 // pred_region
      %59 = dma.done [#allocation6], 2048
    $region33: #{tpu_custom_call.1} parent=1 // pred_fallthru
      _
    %v60 = vld [vmem:[#allocation2] sm:$0xff]
    %v61 = vld [vmem:[#allocation5] sm:$0xff]
    %v62 = vld [vmem:[#allocation5 + $0x8] sm:$0xff]
    %v63 = vld [vmem:[#allocation5 + $0x10] sm:$0xff]
    %v64 = vld [vmem:[#allocation5 + $0x18] sm:$0xff]
    %v65 = vld [vmem:[#allocation5 + $0x20] sm:$0xff]
    %v66 = vld [vmem:[#allocation5 + $0x28] sm:$0xff]
    %v67 = vld [vmem:[#allocation5 + $0x30] sm:$0xff]
    %v68 = vld [vmem:[#allocation5 + $0x38] sm:$0xff]
    %v69 = vld [vmem:[#allocation5 + $0x40] sm:$0xff]
    %v70 = vld [vmem:[#allocation5 + $0x48] sm:$0xff]
    %v71 = vld [vmem:[#allocation5 + $0x50] sm:$0xff]
    %v72 = vld [vmem:[#allocation5 + $0x58] sm:$0xff]
    %v73 = vld [vmem:[#allocation5 + $0x60] sm:$0xff]
    %v74 = vld [vmem:[#allocation5 + $0x68] sm:$0xff]
    %v75 = vld [vmem:[#allocation5 + $0x70] sm:$0xff]
    %v76 = vld [vmem:[#allocation5 + $0x78] sm:$0xff]
    %v77 = vld [vmem:[%s2] sm:$0x1]
    %v79 = vlaneseq
    %v80 = vshrl.u32 %v79, 7
    %v81 = vsub.s32 0, %v80
    %v82 = vrot.slane %v77, %v81
    %84 = vmatprep.subr.mxu0 0.0
    %85 = vmatpush1.msra.mxu0 %v61
    %86 = vmatprep.subr.mxu0 0.0
    %87 = vmatpush1.msra.mxu0 %v62
    %88 = vmatprep.subr.mxu0 0.0
    %89 = vmatpush1.msra.mxu0 %v63
    %90 = vmatprep.subr.mxu0 0.0
    %91 = vmatpush1.msra.mxu0 %v64
    %92 = vmatprep.subr.mxu0 0.0
    %93 = vmatpush1.msra.mxu0 %v65
    %94 = vmatprep.subr.mxu0 0.0
    %95 = vmatpush1.msra.mxu0 %v66
    %96 = vmatprep.subr.mxu0 0.0
    %97 = vmatpush1.msra.mxu0 %v67
    %98 = vmatprep.subr.mxu0 0.0
    %99 = vmatpush1.msra.mxu0 %v68
    %100 = vmatprep.subr.mxu0 0.0
    %101 = vmatpush1.msra.mxu0 %v69
    %102 = vmatprep.subr.mxu0 0.0
    %103 = vmatpush1.msra.mxu0 %v70
    %104 = vmatprep.subr.mxu0 0.0
    %105 = vmatpush1.msra.mxu0 %v71
    %106 = vmatprep.subr.mxu0 0.0
    %107 = vmatpush1.msra.mxu0 %v72
    %108 = vmatprep.subr.mxu0 0.0
    %109 = vmatpush1.msra.mxu0 %v73
    %110 = vmatprep.subr.mxu0 0.0
    %111 = vmatpush1.msra.mxu0 %v74
    %112 = vmatprep.subr.mxu0 0.0
    %113 = vmatpush1.msra.mxu0 %v75
    %114 = vmatprep.subr.mxu0 0.0
    %115 = vmatpush1.msra.mxu0 %v76
    %116 = vmatprep.subr.mxu0 0.0
    %117 = vmatpush1.msra.mxu0 0.0
    %118 = vmatprep.subr.mxu0 0.0
    %119 = vmatpush1.msra.mxu0 0.0
    %120 = vmatprep.subr.mxu0 0.0
    %121 = vmatpush1.msra.mxu0 0.0
    %122 = vmatprep.subr.mxu0 0.0
    %123 = vmatpush1.msra.mxu0 0.0
    %124 = vmatprep.subr.mxu0 0.0
    %125 = vmatpush1.msra.mxu0 0.0
    %126 = vmatprep.subr.mxu0 0.0
    %127 = vmatpush1.msra.mxu0 0.0
    %128 = vmatprep.subr.mxu0 0.0
    %129 = vmatpush1.msra.mxu0 0.0
    %130 = vmatprep.subr.mxu0 0.0
    %131 = vmatpush1.msra.mxu0 0.0
    %132 = vmatprep.subr.mxu0 0.0
    %133 = vmatpush1.msra.mxu0 0.0
    %134 = vmatprep.subr.mxu0 0.0
    %135 = vmatpush1.msra.mxu0 0.0
    %136 = vmatprep.subr.mxu0 0.0
    %137 = vmatpush1.msra.mxu0 0.0
    %138 = vmatprep.subr.mxu0 0.0
    %139 = vmatpush1.msra.mxu0 0.0
    %140 = vmatprep.subr.mxu0 0.0
    %141 = vmatpush1.msra.mxu0 0.0
    %142 = vmatprep.subr.mxu0 0.0
    %143 = vmatpush1.msra.mxu0 0.0
    %144 = vmatprep.subr.mxu0 0.0
    %145 = vmatpush1.msra.mxu0 0.0
    %146 = vmatprep.subr.mxu0 0.0
    %147 = vmatpush1.msra.mxu0 0.0
    %148 = vmatprep.mubr.f32.mxu0 0.0
    %149 = vmatmul.mubr.f32.gmra.mrb[0].mxu0 %v60
    %v150 = vpop.f32.mrb[0].mxu0
    %v151 = vadd.f32 %v82, %v150
    %v152 = vpop.f32.mrb[0].mxu0
    %153 = vdwg.mxu0
    %v154 = vmax.f32 %v151, 0.0
    %v155 = vld [vmem:[#allocation7] sm:$0xff]
    %v156 = vld [vmem:[#allocation7 + $0x8] sm:$0xff]
    %v157 = vld [vmem:[#allocation7 + $0x10] sm:$0xff]
    %v158 = vld [vmem:[#allocation7 + $0x18] sm:$0xff]
    %v159 = vld [vmem:[#allocation7 + $0x20] sm:$0xff]
    %v160 = vld [vmem:[#allocation7 + $0x28] sm:$0xff]
    %v161 = vld [vmem:[#allocation7 + $0x30] sm:$0xff]
    %v162 = vld [vmem:[#allocation7 + $0x38] sm:$0xff]
    %v163 = vld [vmem:[#allocation7 + $0x40] sm:$0xff]
    %v164 = vld [vmem:[#allocation7 + $0x48] sm:$0xff]
    %v165 = vld [vmem:[#allocation7 + $0x50] sm:$0xff]
    %v166 = vld [vmem:[#allocation7 + $0x58] sm:$0xff]
    %v167 = vld [vmem:[#allocation7 + $0x60] sm:$0xff]
    %v168 = vld [vmem:[#allocation7 + $0x68] sm:$0xff]
    %v169 = vld [vmem:[#allocation7 + $0x70] sm:$0xff]
    %v170 = vld [vmem:[#allocation7 + $0x78] sm:$0xff]
    %v171 = vld [vmem:[%s4] sm:$0x1]
    %v173 = vlaneseq
    %v174 = vshrl.u32 %v173, 7
    %v175 = vsub.s32 0, %v174
    %v176 = vrot.slane %v171, %v175
    %178 = vmatprep.subr.mxu0 0.0
    %179 = vmatpush1.msra.mxu0 %v155
    %180 = vmatprep.subr.mxu0 0.0
    %181 = vmatpush1.msra.mxu0 %v156
    %182 = vmatprep.subr.mxu0 0.0
    %183 = vmatpush1.msra.mxu0 %v157
    %184 = vmatprep.subr.mxu0 0.0
    %185 = vmatpush1.msra.mxu0 %v158
    %186 = vmatprep.subr.mxu0 0.0
    %187 = vmatpush1.msra.mxu0 %v159
    %188 = vmatprep.subr.mxu0 0.0
    %189 = vmatpush1.msra.mxu0 %v160
    %190 = vmatprep.subr.mxu0 0.0
    %191 = vmatpush1.msra.mxu0 %v161
    %192 = vmatprep.subr.mxu0 0.0
    %193 = vmatpush1.msra.mxu0 %v162
    %194 = vmatprep.subr.mxu0 0.0
    %195 = vmatpush1.msra.mxu0 %v163
    %196 = vmatprep.subr.mxu0 0.0
    %197 = vmatpush1.msra.mxu0 %v164
    %198 = vmatprep.subr.mxu0 0.0
    %199 = vmatpush1.msra.mxu0 %v165
    %200 = vmatprep.subr.mxu0 0.0
    %201 = vmatpush1.msra.mxu0 %v166
    %202 = vmatprep.subr.mxu0 0.0
    %203 = vmatpush1.msra.mxu0 %v167
    %204 = vmatprep.subr.mxu0 0.0
    %205 = vmatpush1.msra.mxu0 %v168
    %206 = vmatprep.subr.mxu0 0.0
    %207 = vmatpush1.msra.mxu0 %v169
    %208 = vmatprep.subr.mxu0 0.0
    %209 = vmatpush1.msra.mxu0 %v170
    %210 = vmatprep.subr.mxu0 0.0
    %211 = vmatpush1.msra.mxu0 0.0
    %212 = vmatprep.subr.mxu0 0.0
    %213 = vmatpush1.msra.mxu0 0.0
    %214 = vmatprep.subr.mxu0 0.0
    %215 = vmatpush1.msra.mxu0 0.0
    %216 = vmatprep.subr.mxu0 0.0
    %217 = vmatpush1.msra.mxu0 0.0
    %218 = vmatprep.subr.mxu0 0.0
    %219 = vmatpush1.msra.mxu0 0.0
    %220 = vmatprep.subr.mxu0 0.0
    %221 = vmatpush1.msra.mxu0 0.0
    %222 = vmatprep.subr.mxu0 0.0
    %223 = vmatpush1.msra.mxu0 0.0
    %224 = vmatprep.subr.mxu0 0.0
    %225 = vmatpush1.msra.mxu0 0.0
    %226 = vmatprep.subr.mxu0 0.0
    %227 = vmatpush1.msra.mxu0 0.0
    %228 = vmatprep.subr.mxu0 0.0
    %229 = vmatpush1.msra.mxu0 0.0
    %230 = vmatprep.subr.mxu0 0.0
    %231 = vmatpush1.msra.mxu0 0.0
    %232 = vmatprep.subr.mxu0 0.0
    %233 = vmatpush1.msra.mxu0 0.0
    %234 = vmatprep.subr.mxu0 0.0
    %235 = vmatpush1.msra.mxu0 0.0
    %236 = vmatprep.subr.mxu0 0.0
    %237 = vmatpush1.msra.mxu0 0.0
    %238 = vmatprep.subr.mxu0 0.0
    %239 = vmatpush1.msra.mxu0 0.0
    %240 = vmatprep.subr.mxu0 0.0
    %241 = vmatpush1.msra.mxu0 0.0
    %242 = vmatprep.mubr.f32.mxu0 0.0
    %243 = vmatmul.mubr.f32.gmra.mrb[0].mxu0 %v154
    %v244 = vpop.f32.mrb[0].mxu0
    %v245 = vadd.f32 %v176, %v244
    %v246 = vpop.f32.mrb[0].mxu0
    %247 = vdwg.mxu0
    %v248 = vmax.f32 %v245, 0.0
    %249 = vst [vmem:[#allocation8] sm:$0xff] %v248
    // Predicated region
    $region34: #{tpu_custom_call.1} parent=1 // pred_check
      _
    $region35: #{tpu_custom_call.1} parent=1 // pred_check_branch
      %251 = sbr.rel (0) target = $region37
    $region36: #{tpu_custom_call.1} parent=1 // pred_region
      %s253 = ssub.s32 128, 128
      %254 = vsyncadd [#allocation4], %s253
      %s256 = sshll.u32 [#allocation8], 4
      %s257 = int_to_ptr.vmem [resolvable:$true] %s256
      %259 = dma.vmem_to_hbm [thread:$0]  %s257, 128, %s5, [#allocation4]
    $region37: #{tpu_custom_call.1} parent=1 // pred_fallthru
      _
    // Predicated region
    $region38: #{tpu_custom_call.1} parent=1 // pred_check
      _
    $region39: #{tpu_custom_call.1} parent=1 // pred_check_branch
      %261 = sbr.rel (0) target = $region41
    $region40: #{tpu_custom_call.1} parent=1 // pred_region
      %262 = dma.done [#allocation4], 128
    $region41: #{tpu_custom_call.1} parent=1 // pred_fallthru
      _
    %263 = vsyncpa [#allocation3], 1
    %264 = vsyncpa [#allocation6], 1
    %265 = vsyncpa [#allocation4], 1

</llo_original>
